<compile_context>
chip_gen: v7x
topology: tpu7x:2x2x1
jax: 0.10.0
libtpu: 0.0.40
codegen_flags: <defaults>
</compile_context>

<pallas_src>
import jax
import jax.numpy as jnp
from jax.experimental import pallas as pl
from jax.experimental.pallas import tpu as pltpu


TEMPERATURE = 0.5


# --------------------------------------------------------------------------- #
# Kernel
# --------------------------------------------------------------------------- #
def _make_fusion_kernel(num_layers: int, temperature: float):
    inv_t = float(1.0 / temperature)

    def kernel(*refs):
        # refs = (x_0 .. x_{L-1}, w1, b1, w2, b2, out)
        x_refs = refs[:num_layers]
        w1_ref, b1_ref, w2_ref, b2_ref, out_ref = refs[num_layers:]

        w1 = w1_ref[...]                              # [D, H] — feature dtype (MXU input)
        b1 = b1_ref[...].astype(jnp.float32)          # [1, H]
        w2 = w2_ref[...].astype(jnp.float32)          # [1, H]
        b2 = b2_ref[0]                                # scalar bias (SMEM)

        xs = [x_refs[l][...] for l in range(num_layers)]   # each [TB, D], native dtype

        # --- attn MLP: Linear(D->H) + Tanh + Linear(H->1), per layer ---------
        # L is small & static -> fully unrolled; each matmul has M = TB rows.
        scores = []
        for l in range(num_layers):
            h = jnp.dot(xs[l], w1, preferred_element_type=jnp.float32)   # [TB, H] MXU
            t = jnp.tanh(h + b1)                                          # EUP
            s = jnp.sum(t * w2, axis=-1, keepdims=True) + b2              # [TB, 1]
            scores.append(s * inv_t)                                      # temperature

        # --- softmax over the layer axis, column-wise (pure VPU) -------------
        m = scores[0]
        for l in range(1, num_layers):
            m = jnp.maximum(m, scores[l])
        exps = [jnp.exp(s - m) for s in scores]
        denom = exps[0]
        for l in range(1, num_layers):
            denom = denom + exps[l]
        inv_denom = 1.0 / denom                                           # [TB, 1]

        # --- weighted sum over layers: unrolled FMAs, f32 accumulation -------
        acc = (exps[0] * inv_denom) * xs[0].astype(jnp.float32)
        for l in range(1, num_layers):
            acc = acc + (exps[l] * inv_denom) * xs[l].astype(jnp.float32)
        out_ref[...] = acc.astype(out_ref.dtype)

    return kernel


# --------------------------------------------------------------------------- #
# Wrapper
# --------------------------------------------------------------------------- #
def _pick_batch_tile(batch, feature_dim, num_layers, in_itemsize, out_itemsize,
                     vmem_budget_bytes=12 << 20, max_rows=1024):
    """Largest batch tile (multiple of 8, divides B) fitting a conservative
    VMEM budget, accounting for double-buffered input/output blocks.  The
    12 MiB budget keeps headroom under the default scoped VMEM on all of
    v5e / v6e / v7x (v7x has only 64 MiB physical VMEM per TC)."""
    per_row = 2 * feature_dim * (num_layers * in_itemsize + out_itemsize)
    rows = int(max(8, min(max_rows, vmem_budget_bytes // max(per_row, 1))))
    rows = (rows // 8) * 8
    if batch <= rows:
        return batch            # full batch as one block (always legal)
    for tb in range(rows, 7, -8):
        if batch % tb == 0:
            return tb
    return batch                # fallback: no nice divisor -> single block


def multi_layer_feature_fusion(features, w1, b1, w2, b2,
                               *, temperature=TEMPERATURE, block_b=None):
    """features: list of [B, D] arrays (length = num_layers).
       w1: [D, H], b1: [H], w2: [H], b2: [1]  (the attn MLP parameters)."""
    num_layers = len(features)
    B, D = features[0].shape
    H = w1.shape[1]
    x_dtype = features[0].dtype
    in_itemsize = jnp.dtype(x_dtype).itemsize

    if block_b is None:
        block_b = _pick_batch_tile(B, D, num_layers, in_itemsize, in_itemsize)
    assert B % block_b == 0, f"batch tile {block_b} must divide batch {B}"
    grid = (B // block_b,)

    # Keep MXU inputs in the feature dtype (bf16 features => bf16 matmul, f32 acc).
    w1c = w1.astype(x_dtype)
    b1_2d = b1.reshape(1, H).astype(jnp.float32)
    w2_2d = w2.reshape(1, H).astype(jnp.float32)
    b2_1d = b2.reshape(1).astype(jnp.float32)

    feat_spec = pl.BlockSpec((block_b, D), lambda i: (i, 0))
    in_specs = [feat_spec] * num_layers + [
        pl.BlockSpec((D, H), lambda i: (0, 0)),                      # w1 (pinned)
        pl.BlockSpec((1, H), lambda i: (0, 0)),                      # b1 (pinned)
        pl.BlockSpec((1, H), lambda i: (0, 0)),                      # w2 (pinned)
        pl.BlockSpec(memory_space=pltpu.MemorySpace.SMEM),           # b2 scalar
    ]
    out_spec = pl.BlockSpec((block_b, D), lambda i: (i, 0))

    cost = pl.CostEstimate(
        flops=2 * B * num_layers * D * H        # Linear(D->H)
              + 2 * B * num_layers * H          # Linear(H->1)
              + 2 * B * num_layers * D,         # weighted sum
        transcendentals=B * num_layers * (H + 1),   # tanh + exp
        bytes_accessed=num_layers * B * D * in_itemsize
                       + B * D * in_itemsize
                       + D * H * in_itemsize,
    )

    return pl.pallas_call(
        _make_fusion_kernel(num_layers, temperature),
        out_shape=jax.ShapeDtypeStruct((B, D), x_dtype),
        grid=grid,
        in_specs=in_specs,
        out_specs=out_spec,
        compiler_params=pltpu.CompilerParams(
            dimension_semantics=("parallel",)),
        cost_estimate=cost,
    )(*features, w1c, b1_2d, w2_2d, b2_1d)


# --------------------------------------------------------------------------- #
# Reference + test harness
# --------------------------------------------------------------------------- #
def reference_fusion(features, w1, b1, w2, b2, temperature=TEMPERATURE):
    x = jnp.stack(features, axis=1).astype(jnp.float32)       # [B, L, D]
    h = jnp.tanh(jnp.einsum("bld,dh->blh", x, w1) + b1)        # [B, L, H]
    scores = jnp.einsum("blh,h->bl", h, w2) + b2[0]            # [B, L]
    w = jax.nn.softmax(scores / temperature, axis=-1)
    return jnp.sum(w[:, :, None] * x, axis=1)


def init_linear(key, fan_in, fan_out):
    # Mimic torch.nn.Linear default init: U(-1/sqrt(fan_in), 1/sqrt(fan_in)).
    kw, kb = jax.random.split(key)
    bound = 1.0 / jnp.sqrt(fan_in)
    w = jax.random.uniform(kw, (fan_in, fan_out), jnp.float32, -bound, bound)
    b = jax.random.uniform(kb, (fan_out,), jnp.float32, -bound, bound)
    return w, b


if __name__ == "__main__":
    # Small, hardware-friendly shapes consistent with the module semantics
    # (feature_dim/hidden_dim scaled down; H kept a multiple of 128 for
    # lane-dense intermediates).
    B, L, D, H = 64, 3, 256, 128   # batch, num_layers, feature_dim, hidden_dim

    key = jax.random.PRNGKey(0)
    kf, k1, k2 = jax.random.split(key, 3)

    # attn = Linear(D, H) -> Tanh -> Linear(H, 1)
    w1, b1 = init_linear(k1, D, H)        # w1: [D, H], b1: [H]
    w2_full, b2 = init_linear(k2, H, 1)   # w2_full: [H, 1], b2: [1]
    w2 = w2_full[:, 0]                    # [H]

    # Deterministic synthetic input features: list of L tensors [B, D].
    feats = [jax.random.normal(jax.random.fold_in(kf, i), (B, D), jnp.float32)
             for i in range(L)]

    # block_b=16 -> grid=(4,) to exercise the batch-tiled, pinned-weight path.
    out = multi_layer_feature_fusion(feats, w1, b1, w2, b2, block_b=16)
    out = jax.block_until_ready(out)

    ref = reference_fusion(feats, w1, b1, w2, b2)
    assert out.shape == (B, D)
    assert jnp.allclose(out, ref, atol=3e-5, rtol=1e-5), "mismatch vs reference"

    print("KERNEL_OK")
</pallas_src>

<mosaic_0001>
module attributes {stable_mosaic.version = 11 : i64} {
  func.func @kernel(%arg0: i32, %arg1: memref<16x256xf32, #tpu.memory_space<vmem>>, %arg2: memref<16x256xf32, #tpu.memory_space<vmem>>, %arg3: memref<16x256xf32, #tpu.memory_space<vmem>>, %arg4: memref<256x128xf32, #tpu.memory_space<vmem>>, %arg5: memref<1x128xf32, #tpu.memory_space<vmem>>, %arg6: memref<1x128xf32, #tpu.memory_space<vmem>>, %arg7: memref<1xf32, #tpu.memory_space<smem>>, %arg8: memref<16x256xf32, #tpu.memory_space<vmem>>) attributes {dimension_semantics = [#tpu.dimension_semantics<parallel>], iteration_bounds = array<i64: 4>, scalar_prefetch = 0 : i64, scratch_operands = 0 : i64, tpu.core_type = #tpu.core_type<tc>, window_params = [{transform_indices = @transform_0, window_bounds = array<i64: 16, 256>}, {transform_indices = @transform_1, window_bounds = array<i64: 16, 256>}, {transform_indices = @transform_2, window_bounds = array<i64: 16, 256>}, {pipeline_mode = #tpu.pipeline_mode<synchronous>, transform_indices = @transform_3, window_bounds = array<i64: 256, 128>}, {pipeline_mode = #tpu.pipeline_mode<synchronous>, transform_indices = @transform_4, window_bounds = array<i64: 1, 128>}, {pipeline_mode = #tpu.pipeline_mode<synchronous>, transform_indices = @transform_5, window_bounds = array<i64: 1, 128>}, {transform_indices = @transform_6, window_bounds = array<i64: 1>}, {transform_indices = @transform_7, window_bounds = array<i64: 16, 256>}]} {
    %c0 = arith.constant 0 : index
    %c0_0 = arith.constant 0 : index
    %0 = vector.load %arg4[%c0, %c0_0] : memref<256x128xf32, #tpu.memory_space<vmem>>, vector<256x128xf32>
    %c0_1 = arith.constant 0 : index
    %c0_2 = arith.constant 0 : index
    %1 = vector.load %arg5[%c0_1, %c0_2] : memref<1x128xf32, #tpu.memory_space<vmem>>, vector<1x128xf32>
    %c0_3 = arith.constant 0 : index
    %c0_4 = arith.constant 0 : index
    %2 = vector.load %arg6[%c0_3, %c0_4] : memref<1x128xf32, #tpu.memory_space<vmem>>, vector<1x128xf32>
    %c0_5 = arith.constant 0 : index
    %3 = memref.load %arg7[%c0_5] : memref<1xf32, #tpu.memory_space<smem>>
    %c0_6 = arith.constant 0 : index
    %c0_7 = arith.constant 0 : index
    %4 = vector.load %arg1[%c0_6, %c0_7] : memref<16x256xf32, #tpu.memory_space<vmem>>, vector<16x256xf32>
    %c0_8 = arith.constant 0 : index
    %c0_9 = arith.constant 0 : index
    %5 = vector.load %arg2[%c0_8, %c0_9] : memref<16x256xf32, #tpu.memory_space<vmem>>, vector<16x256xf32>
    %c0_10 = arith.constant 0 : index
    %c0_11 = arith.constant 0 : index
    %6 = vector.load %arg3[%c0_10, %c0_11] : memref<16x256xf32, #tpu.memory_space<vmem>>, vector<16x256xf32>
    %cst = arith.constant dense<0.000000e+00> : vector<16x128xf32>
    %7 = tpu.matmul %4, %0, %cst {dimension_numbers = #tpu.dot_dimension_numbers<[1], [0], [0], [1], [0, 0, 1, 1], [], []>} : vector<16x256xf32>, vector<256x128xf32>, vector<16x128xf32> -> vector<16x128xf32>
    %8 = vector.broadcast %1 : vector<1x128xf32> to vector<16x128xf32>
    %9 = arith.addf %7, %8 : vector<16x128xf32>
    %10 = math.tanh %9 : vector<16x128xf32>
    %11 = vector.broadcast %2 : vector<1x128xf32> to vector<16x128xf32>
    %12 = arith.mulf %10, %11 : vector<16x128xf32>
    %cst_12 = arith.constant dense<0.000000e+00> : vector<16xf32>
    %13 = vector.multi_reduction <add>, %12, %cst_12 [1] : vector<16x128xf32> to vector<16xf32>
    %14 = vector.shape_cast %13 : vector<16xf32> to vector<16x1xf32>
    %15 = vector.broadcast %3 : f32 to vector<16x1xf32>
    %16 = arith.addf %14, %15 : vector<16x1xf32>
    %cst_13 = arith.constant 2.000000e+00 : f32
    %17 = vector.broadcast %cst_13 : f32 to vector<16x1xf32>
    %18 = arith.mulf %16, %17 : vector<16x1xf32>
    %cst_14 = arith.constant dense<0.000000e+00> : vector<16x128xf32>
    %19 = tpu.matmul %5, %0, %cst_14 {dimension_numbers = #tpu.dot_dimension_numbers<[1], [0], [0], [1], [0, 0, 1, 1], [], []>} : vector<16x256xf32>, vector<256x128xf32>, vector<16x128xf32> -> vector<16x128xf32>
    %20 = vector.broadcast %1 : vector<1x128xf32> to vector<16x128xf32>
    %21 = arith.addf %19, %20 : vector<16x128xf32>
    %22 = math.tanh %21 : vector<16x128xf32>
    %23 = vector.broadcast %2 : vector<1x128xf32> to vector<16x128xf32>
    %24 = arith.mulf %22, %23 : vector<16x128xf32>
    %cst_15 = arith.constant dense<0.000000e+00> : vector<16xf32>
    %25 = vector.multi_reduction <add>, %24, %cst_15 [1] : vector<16x128xf32> to vector<16xf32>
    %26 = vector.shape_cast %25 : vector<16xf32> to vector<16x1xf32>
    %27 = vector.broadcast %3 : f32 to vector<16x1xf32>
    %28 = arith.addf %26, %27 : vector<16x1xf32>
    %cst_16 = arith.constant 2.000000e+00 : f32
    %29 = vector.broadcast %cst_16 : f32 to vector<16x1xf32>
    %30 = arith.mulf %28, %29 : vector<16x1xf32>
    %cst_17 = arith.constant dense<0.000000e+00> : vector<16x128xf32>
    %31 = tpu.matmul %6, %0, %cst_17 {dimension_numbers = #tpu.dot_dimension_numbers<[1], [0], [0], [1], [0, 0, 1, 1], [], []>} : vector<16x256xf32>, vector<256x128xf32>, vector<16x128xf32> -> vector<16x128xf32>
    %32 = vector.broadcast %1 : vector<1x128xf32> to vector<16x128xf32>
    %33 = arith.addf %31, %32 : vector<16x128xf32>
    %34 = math.tanh %33 : vector<16x128xf32>
    %35 = vector.broadcast %2 : vector<1x128xf32> to vector<16x128xf32>
    %36 = arith.mulf %34, %35 : vector<16x128xf32>
    %cst_18 = arith.constant dense<0.000000e+00> : vector<16xf32>
    %37 = vector.multi_reduction <add>, %36, %cst_18 [1] : vector<16x128xf32> to vector<16xf32>
    %38 = vector.shape_cast %37 : vector<16xf32> to vector<16x1xf32>
    %39 = vector.broadcast %3 : f32 to vector<16x1xf32>
    %40 = arith.addf %38, %39 : vector<16x1xf32>
    %cst_19 = arith.constant 2.000000e+00 : f32
    %41 = vector.broadcast %cst_19 : f32 to vector<16x1xf32>
    %42 = arith.mulf %40, %41 : vector<16x1xf32>
    %43 = arith.maximumf %18, %30 : vector<16x1xf32>
    %44 = arith.maximumf %43, %42 : vector<16x1xf32>
    %45 = arith.subf %18, %44 : vector<16x1xf32>
    %46 = math.exp %45 : vector<16x1xf32>
    %47 = arith.subf %30, %44 : vector<16x1xf32>
    %48 = math.exp %47 : vector<16x1xf32>
    %49 = arith.subf %42, %44 : vector<16x1xf32>
    %50 = math.exp %49 : vector<16x1xf32>
    %51 = arith.addf %46, %48 : vector<16x1xf32>
    %52 = arith.addf %51, %50 : vector<16x1xf32>
    %cst_20 = arith.constant 1.000000e+00 : f32
    %53 = vector.broadcast %cst_20 : f32 to vector<16x1xf32>
    %54 = arith.divf %53, %52 : vector<16x1xf32>
    %55 = arith.mulf %46, %54 : vector<16x1xf32>
    %56 = vector.broadcast %55 : vector<16x1xf32> to vector<16x256xf32>
    %57 = arith.mulf %56, %4 : vector<16x256xf32>
    %58 = arith.mulf %48, %54 : vector<16x1xf32>
    %59 = vector.broadcast %58 : vector<16x1xf32> to vector<16x256xf32>
    %60 = arith.mulf %59, %5 : vector<16x256xf32>
    %61 = arith.addf %57, %60 : vector<16x256xf32>
    %62 = arith.mulf %50, %54 : vector<16x1xf32>
    %63 = vector.broadcast %62 : vector<16x1xf32> to vector<16x256xf32>
    %64 = arith.mulf %63, %6 : vector<16x256xf32>
    %65 = arith.addf %61, %64 : vector<16x256xf32>
    %c0_21 = arith.constant 0 : index
    %c0_22 = arith.constant 0 : index
    %66 = vector.load %arg8[%c0_21, %c0_22] : memref<16x256xf32, #tpu.memory_space<vmem>>, vector<16x256xf32>
    tpu.vector_store %arg8[%c0_21, %c0_22], %65 {strides = array<i32>} : memref<16x256xf32, #tpu.memory_space<vmem>>, vector<16x256xf32>,
    return
  }
  func.func @transform_0(%arg0: i32) -> (i32, i32) {
    %c0_i32 = arith.constant 0 : i32
    %c0_i32_0 = arith.constant 0 : i32
    return %arg0, %c0_i32 : i32, i32
  }
  func.func @transform_1(%arg0: i32) -> (i32, i32) {
    %c0_i32 = arith.constant 0 : i32
    %c0_i32_0 = arith.constant 0 : i32
    return %arg0, %c0_i32 : i32, i32
  }
  func.func @transform_2(%arg0: i32) -> (i32, i32) {
    %c0_i32 = arith.constant 0 : i32
    %c0_i32_0 = arith.constant 0 : i32
    return %arg0, %c0_i32 : i32, i32
  }
  func.func @transform_3(%arg0: i32) -> (i32, i32) {
    %c0_i32 = arith.constant 0 : i32
    %c0_i32_0 = arith.constant 0 : i32
    %c0_i32_1 = arith.constant 0 : i32
    return %c0_i32, %c0_i32_0 : i32, i32
  }
  func.func @transform_4(%arg0: i32) -> (i32, i32) {
    %c0_i32 = arith.constant 0 : i32
    %c0_i32_0 = arith.constant 0 : i32
    %c0_i32_1 = arith.constant 0 : i32
    return %c0_i32, %c0_i32_0 : i32, i32
  }
  func.func @transform_5(%arg0: i32) -> (i32, i32) {
    %c0_i32 = arith.constant 0 : i32
    %c0_i32_0 = arith.constant 0 : i32
    %c0_i32_1 = arith.constant 0 : i32
    return %c0_i32, %c0_i32_0 : i32, i32
  }
  func.func @transform_6(%arg0: i32) -> i32 {
    %c0_i32 = arith.constant 0 : i32
    %c0_i32_0 = arith.constant 0 : i32
    return %c0_i32 : i32
  }
  func.func @transform_7(%arg0: i32) -> (i32, i32) {
    %c0_i32 = arith.constant 0 : i32
    %c0_i32_0 = arith.constant 0 : i32
    return %arg0, %c0_i32 : i32, i32
  }
}

</mosaic_0001>

<llo_original>
// kernel: tpu_custom_call.1
$region0: #{tpu_custom_call.1}
  #allocation0 [shape = 'u32[]', space=smem, size = 0x4, offset = 0x4, fixed_abs, tag = 'smem constant byte address 0x4 - core index']
  #allocation1 [shape = 'u32[144,128]{1,0:T(1,128)}', space=vmem, size = 0x12000, scoped, tag = 'internal scratch']
  #allocation2 [shape = 'f32[1]{0:T(128)S(6)}', space=smem, size = 0x200, scoped, tag = 'scoped memory for tpu_custom_call.1']
  %s0 = inlined_call_operand.hbm [shape: f32[64,256], index: 0, kind: input, shape index: {}]
  %s1 = inlined_call_operand.hbm [shape: f32[64,256], index: 1, kind: input, shape index: {}]
  %s2 = inlined_call_operand.hbm [shape: f32[64,256], index: 2, kind: input, shape index: {}]
  %s3 = inlined_call_operand.hbm [shape: f32[256,128], index: 3, kind: input, shape index: {}]
  %s4 = inlined_call_operand.vmem [shape: f32[1,128], index: 4, kind: input, shape index: {}]
  %s5 = inlined_call_operand.vmem [shape: f32[1,128], index: 5, kind: input, shape index: {}]
  %s6 = inlined_call_operand.<no memory space> [shape: f32[1], index: 6, kind: input, shape index: {}]
  %s7 = inlined_call_operand.hbm [shape: f32[64,256], index: 7, kind: output, shape index: {}]
  %s8 = sld [smem:[#allocation0]]
  $region77: #{tpu_custom_call.1} parent=0
    _
  %s10 = ssub.s32 1, %s8
  %s11 = scalar_select 0, %s10, %s8
  %12 = sst [smem:[#allocation2]] %s6
  $region1: #{tpu_custom_call.1} parent=0
    #allocation3 [shape = 'u8[32768]{0}', space=vmem, size = 0x8000, scoped, tag = 'input window, operand 0']
    #allocation4 [shape = 's32[2]{0}', space=sflag, size = 0x8, scoped, tag = 'scoped memory for tpu_custom_call.1']
    #allocation5 [shape = 's32[2]{0}', space=sflag, size = 0x8, scoped, tag = 'scoped memory for tpu_custom_call.1']
    #allocation6 [shape = 'u8[32768]{0}', space=vmem, size = 0x8000, scoped, tag = 'input window, operand 1']
    #allocation7 [shape = 's32[2]{0}', space=sflag, size = 0x8, scoped, tag = 'scoped memory for tpu_custom_call.1']
    #allocation8 [shape = 'u8[32768]{0}', space=vmem, size = 0x8000, scoped, tag = 'input window, operand 2']
    #allocation9 [shape = 'u8[131072]{0}', space=vmem, size = 0x20000, scoped, tag = 'input window, operand 3, single buffered']
    #allocation10 [shape = 's32[1]{0}', space=sflag, size = 0x4, scoped, tag = 'scoped memory for tpu_custom_call.1']
    #allocation11 [shape = 'u8[32768]{0}', space=vmem, size = 0x8000, scoped, tag = 'output window, operand 0']
    %13 = vsyncpa [#allocation4], 0
    %s14 = scalar_lea.sflag [#allocation4], 1
    %15 = vsyncpa %s14, 0
    %16 = vsyncpa [#allocation7], 0
    %s17 = scalar_lea.sflag [#allocation7], 1
    %18 = vsyncpa %s17, 0
    %19 = vsyncpa [#allocation10], 0
    %20 = vsyncpa [#allocation5], 0
    %s21 = scalar_lea.sflag [#allocation5], 1
    %22 = vsyncpa %s21, 0
    loop: start=0, step=1, limit=6
    $region2: #{tpu_custom_call.1} parent=1 // loop_pre_header
      _
    $region3: #{tpu_custom_call.1} parent=1 // loop_header
      %s24 = sphi 0, %s28
      %p25 = scmp.ge.s32.totalorder %s24, 6
      %s34 = sphi 0, %s36
      %s37 = sphi 0, %s34
      %s38 = sphi 0, %s37
      %s54 = sphi 0, %s38
      %s60 = sphi 0, %s62
      %s63 = sphi 0, %s60
      %s64 = sphi 0, %s63
      %s80 = sphi 0, %s64
      %s86 = sphi 0, %s88
      %s89 = sphi 0, %s86
      %s90 = sphi 0, %s89
      %s106 = sphi 0, %s90
      %s110 = sphi 0, %s110
      %s112 = sphi 0, %s110
      %s113 = sphi 0, %s112
      %s127 = sphi 0, %s113
      %s131 = sphi 0, %s131
      %s133 = sphi 0, %s131
      %s134 = sphi 0, %s133
      %s148 = sphi 0, %s134
      %s152 = sphi 0, %s152
      %s154 = sphi 0, %s152
      %s155 = sphi 0, %s154
      %s169 = sphi 0, %s155
      %s173 = sphi 0, %s173
      %s175 = sphi 0, %s173
      %s176 = sphi 0, %s175
      %s190 = sphi 0, %s176
      %s196 = sphi 0, %s198
      %s199 = sphi 0, %s196
      %s200 = sphi 0, %s199
      %s216 = sphi 0, %s200
    $region4: #{tpu_custom_call.1} parent=1 // loop_header_branch
      %27 = sbr.rel (%p25) target = $region8
    $region5: #{tpu_custom_call.1} parent=1 // loop_body
      %s29 = ssub.s32 %s24, 1
      %s30 = ssub.s32 %s24, 2
      %s31 = sadd.s32 %s24, 1
      %s32 = ssub.s32 %s24, %s31
      %p33 = scmp.eq.s32.totalorder %s32, 0
      %s35 = sadd.s32 %s34, 1
      %s36 = scalar_select %p33, %s34, %s35
      %p39 = pneg %p33
      %p40 = scmp.eq.s32.totalorder %s24, 3
      %p41 = por %p39, %p40
      %p42 = scmp.ne.s32.totalorder %s34, %s37
      %p43 = scmp.eq.s32.totalorder %s24, 0
      %p44 = por %p42, %p43
      %p45 = scmp.ne.s32.totalorder %s34, %s37
      %p46 = scmp.eq.s32.totalorder %s29, 3
      %p47 = por %p45, %p46
      %p48 = scmp.ne.s32.totalorder %s37, %s38
      %p49 = scmp.eq.s32.totalorder %s29, 0
      %p50 = por %p48, %p49
      %p51 = scmp.ne.s32.totalorder %s37, %s38
      %p52 = scmp.eq.s32.totalorder %s30, 3
      %p53 = por %p51, %p52
      %p55 = scmp.ne.s32.totalorder %s38, %s54
      %p56 = scmp.eq.s32.totalorder %s30, 0
      %p57 = por %p55, %p56
      %s58 = ssub.s32 %s24, %s31
      %p59 = scmp.eq.s32.totalorder %s58, 0
      %s61 = sadd.s32 %s60, 1
      %s62 = scalar_select %p59, %s60, %s61
      %p65 = pneg %p59
      %p66 = scmp.eq.s32.totalorder %s24, 3
      %p67 = por %p65, %p66
      %p68 = scmp.ne.s32.totalorder %s60, %s63
      %p69 = scmp.eq.s32.totalorder %s24, 0
      %p70 = por %p68, %p69
      %p71 = scmp.ne.s32.totalorder %s60, %s63
      %p72 = scmp.eq.s32.totalorder %s29, 3
      %p73 = por %p71, %p72
      %p74 = scmp.ne.s32.totalorder %s63, %s64
      %p75 = scmp.eq.s32.totalorder %s29, 0
      %p76 = por %p74, %p75
      %p77 = scmp.ne.s32.totalorder %s63, %s64
      %p78 = scmp.eq.s32.totalorder %s30, 3
      %p79 = por %p77, %p78
      %p81 = scmp.ne.s32.totalorder %s64, %s80
      %p82 = scmp.eq.s32.totalorder %s30, 0
      %p83 = por %p81, %p82
      %s84 = ssub.s32 %s24, %s31
      %p85 = scmp.eq.s32.totalorder %s84, 0
      %s87 = sadd.s32 %s86, 1
      %s88 = scalar_select %p85, %s86, %s87
      %p91 = pneg %p85
      %p92 = scmp.eq.s32.totalorder %s24, 3
      %p93 = por %p91, %p92
      %p94 = scmp.ne.s32.totalorder %s86, %s89
      %p95 = scmp.eq.s32.totalorder %s24, 0
      %p96 = por %p94, %p95
      %p97 = scmp.ne.s32.totalorder %s86, %s89
      %p98 = scmp.eq.s32.totalorder %s29, 3
      %p99 = por %p97, %p98
      %p100 = scmp.ne.s32.totalorder %s89, %s90
      %p101 = scmp.eq.s32.totalorder %s29, 0
      %p102 = por %p100, %p101
      %p103 = scmp.ne.s32.totalorder %s89, %s90
      %p104 = scmp.eq.s32.totalorder %s30, 3
      %p105 = por %p103, %p104
      %p107 = scmp.ne.s32.totalorder %s90, %s106
      %p108 = scmp.eq.s32.totalorder %s30, 0
      %p109 = por %p107, %p108
      %s111 = sadd.s32 %s110, 1
      %p114 = scmp.eq.s32.totalorder %s24, 3
      %p115 = scmp.ne.s32.totalorder %s110, %s112
      %p116 = scmp.eq.s32.totalorder %s24, 0
      %p117 = por %p115, %p116
      %p118 = scmp.ne.s32.totalorder %s110, %s112
      %p119 = scmp.eq.s32.totalorder %s29, 3
      %p120 = por %p118, %p119
      %p121 = scmp.ne.s32.totalorder %s112, %s113
      %p122 = scmp.eq.s32.totalorder %s29, 0
      %p123 = por %p121, %p122
      %p124 = scmp.ne.s32.totalorder %s112, %s113
      %p125 = scmp.eq.s32.totalorder %s30, 3
      %p126 = por %p124, %p125
      %p128 = scmp.ne.s32.totalorder %s113, %s127
      %p129 = scmp.eq.s32.totalorder %s30, 0
      %p130 = por %p128, %p129
      %s132 = sadd.s32 %s131, 1
      %p135 = scmp.eq.s32.totalorder %s24, 3
      %p136 = scmp.ne.s32.totalorder %s131, %s133
      %p137 = scmp.eq.s32.totalorder %s24, 0
      %p138 = por %p136, %p137
      %p139 = scmp.ne.s32.totalorder %s131, %s133
      %p140 = scmp.eq.s32.totalorder %s29, 3
      %p141 = por %p139, %p140
      %p142 = scmp.ne.s32.totalorder %s133, %s134
      %p143 = scmp.eq.s32.totalorder %s29, 0
      %p144 = por %p142, %p143
      %p145 = scmp.ne.s32.totalorder %s133, %s134
      %p146 = scmp.eq.s32.totalorder %s30, 3
      %p147 = por %p145, %p146
      %p149 = scmp.ne.s32.totalorder %s134, %s148
      %p150 = scmp.eq.s32.totalorder %s30, 0
      %p151 = por %p149, %p150
      %s153 = sadd.s32 %s152, 1
      %p156 = scmp.eq.s32.totalorder %s24, 3
      %p157 = scmp.ne.s32.totalorder %s152, %s154
      %p158 = scmp.eq.s32.totalorder %s24, 0
      %p159 = por %p157, %p158
      %p160 = scmp.ne.s32.totalorder %s152, %s154
      %p161 = scmp.eq.s32.totalorder %s29, 3
      %p162 = por %p160, %p161
      %p163 = scmp.ne.s32.totalorder %s154, %s155
      %p164 = scmp.eq.s32.totalorder %s29, 0
      %p165 = por %p163, %p164
      %p166 = scmp.ne.s32.totalorder %s154, %s155
      %p167 = scmp.eq.s32.totalorder %s30, 3
      %p168 = por %p166, %p167
      %p170 = scmp.ne.s32.totalorder %s155, %s169
      %p171 = scmp.eq.s32.totalorder %s30, 0
      %p172 = por %p170, %p171
      %s174 = sadd.s32 %s173, 1
      %p177 = scmp.eq.s32.totalorder %s24, 3
      %p178 = scmp.ne.s32.totalorder %s173, %s175
      %p179 = scmp.eq.s32.totalorder %s24, 0
      %p180 = por %p178, %p179
      %p181 = scmp.ne.s32.totalorder %s173, %s175
      %p182 = scmp.eq.s32.totalorder %s29, 3
      %p183 = por %p181, %p182
      %p184 = scmp.ne.s32.totalorder %s175, %s176
      %p185 = scmp.eq.s32.totalorder %s29, 0
      %p186 = por %p184, %p185
      %p187 = scmp.ne.s32.totalorder %s175, %s176
      %p188 = scmp.eq.s32.totalorder %s30, 3
      %p189 = por %p187, %p188
      %p191 = scmp.ne.s32.totalorder %s176, %s190
      %p192 = scmp.eq.s32.totalorder %s30, 0
      %p193 = por %p191, %p192
      %s194 = ssub.s32 %s24, %s31
      %p195 = scmp.eq.s32.totalorder %s194, 0
      %s197 = sadd.s32 %s196, 1
      %s198 = scalar_select %p195, %s196, %s197
      %p201 = pneg %p195
      %p202 = scmp.eq.s32.totalorder %s24, 3
      %p203 = por %p201, %p202
      %p204 = scmp.ne.s32.totalorder %s196, %s199
      %p205 = scmp.eq.s32.totalorder %s24, 0
      %p206 = por %p204, %p205
      %p207 = scmp.ne.s32.totalorder %s196, %s199
      %p208 = scmp.eq.s32.totalorder %s29, 3
      %p209 = por %p207, %p208
      %p210 = scmp.ne.s32.totalorder %s199, %s200
      %p211 = scmp.eq.s32.totalorder %s29, 0
      %p212 = por %p210, %p211
      %p213 = scmp.ne.s32.totalorder %s199, %s200
      %p214 = scmp.eq.s32.totalorder %s30, 3
      %p215 = por %p213, %p214
      %p217 = scmp.ne.s32.totalorder %s200, %s216
      %p218 = scmp.eq.s32.totalorder %s30, 0
      %p219 = por %p217, %p218
      %p220 = scmp.le.s32.totalorder 1, %s24
      %p221 = scmp.lt.s32.totalorder %s24, 5
      %p222 = pnand %p220, %p221
      %p223 = pneg %p222
      // Predicated region
      $region9: #{tpu_custom_call.1} parent=5 // pred_check
        _
      $region10: #{tpu_custom_call.1} parent=5 // pred_check_branch
        %225 = sbr.rel (%p222) target = $region12
      $region11: #{tpu_custom_call.1} parent=5 // pred_region
        %s226 = ssub.s32 %s24, 1
        // Predicated region
        $region13: #{tpu_custom_call.1} parent=11 // pred_check
          %p227 = pneg %p123
        $region14: #{tpu_custom_call.1} parent=11 // pred_check_branch
          %229 = sbr.rel (%p227) target = $region16
        $region15: #{tpu_custom_call.1} parent=11 // pred_region
          %s231 = ssub.s32 4096, 4096
          %232 = vsyncadd [#allocation10], %s231
          %s233 = sshll.u32 [#allocation9], 4
          %s234 = int_to_ptr.vmem [resolvable:$true] %s233
          %239 = dma.hbm_to_vmem [thread:$0]  %s3, 4096, %s234, [#allocation10], 128, 128, 8
        $region16: #{tpu_custom_call.1} parent=11 // pred_fallthru
          _
        // Predicated region
        $region17: #{tpu_custom_call.1} parent=11 // pred_check
          %p240 = pneg %p144
        $region18: #{tpu_custom_call.1} parent=11 // pred_check_branch
          %242 = sbr.rel (%p240) target = $region20
        $region19: #{tpu_custom_call.1} parent=11 // pred_region
          _
        $region20: #{tpu_custom_call.1} parent=11 // pred_fallthru
          _
        // Predicated region
        $region21: #{tpu_custom_call.1} parent=11 // pred_check
          %p243 = pneg %p165
        $region22: #{tpu_custom_call.1} parent=11 // pred_check_branch
          %245 = sbr.rel (%p243) target = $region24
        $region23: #{tpu_custom_call.1} parent=11 // pred_region
          _
        $region24: #{tpu_custom_call.1} parent=11 // pred_fallthru
          _
        // Predicated region
        $region25: #{tpu_custom_call.1} parent=11 // pred_check
          %p246 = pneg %p186
        $region26: #{tpu_custom_call.1} parent=11 // pred_check_branch
          %248 = sbr.rel (%p246) target = $region28
        $region27: #{tpu_custom_call.1} parent=11 // pred_region
          _
        $region28: #{tpu_custom_call.1} parent=11 // pred_fallthru
          _
      $region12: #{tpu_custom_call.1} parent=5 // pred_fallthru
        _
      %p249 = scmp.lt.s32.totalorder %s24, 4
      // Predicated region
      $region29: #{tpu_custom_call.1} parent=5 // pred_check
        %p250 = pneg %p249
      $region30: #{tpu_custom_call.1} parent=5 // pred_check_branch
        %252 = sbr.rel (%p250) target = $region32
      $region31: #{tpu_custom_call.1} parent=5 // pred_region
        // Predicated region
        $region33: #{tpu_custom_call.1} parent=31 // pred_check
          %p253 = pneg %p44
        $region34: #{tpu_custom_call.1} parent=31 // pred_check_branch
          %255 = sbr.rel (%p253) target = $region36
        $region35: #{tpu_custom_call.1} parent=31 // pred_region
          %s256 = sand.u32 %s34, 1
          %s257 = scalar_lea.sflag [#allocation4], %s256
          %s258 = sand.u32 %s34, 1
          %s259 = smul.addr %s258, 32
          %s260 = scalar_lea.vmem [#allocation3], %s259
          %s261 = smul.u32 2, %s24
          %s263 = ssub.s32 512, 512
          %264 = vsyncadd %s257, %s263
          %s265 = smul.addr %s261, 2
          %s266 = smul.addr %s265, 128
          %s267 = scalar_lea.hbm %s0, %s266
          %s268 = sshll.u32 %s260, 4
          %s269 = int_to_ptr.vmem [resolvable:$true] %s268
          %274 = dma.hbm_to_vmem [thread:$0]  %s267, 512, %s269, %s257, 256, 256, 16
        $region36: #{tpu_custom_call.1} parent=31 // pred_fallthru
          _
        // Predicated region
        $region37: #{tpu_custom_call.1} parent=31 // pred_check
          %p275 = pneg %p70
        $region38: #{tpu_custom_call.1} parent=31 // pred_check_branch
          %277 = sbr.rel (%p275) target = $region40
        $region39: #{tpu_custom_call.1} parent=31 // pred_region
          %s278 = sand.u32 %s24, 1
          %s279 = scalar_lea.sflag [#allocation7], %s278
          %s280 = sand.u32 %s60, 1
          %s281 = smul.addr %s280, 32
          %s282 = scalar_lea.vmem [#allocation6], %s281
          %s283 = smul.u32 2, %s24
          %s285 = ssub.s32 512, 512
          %286 = vsyncadd %s279, %s285
          %s287 = smul.addr %s283, 2
          %s288 = smul.addr %s287, 128
          %s289 = scalar_lea.hbm %s1, %s288
          %s290 = sshll.u32 %s282, 4
          %s291 = int_to_ptr.vmem [resolvable:$true] %s290
          %296 = dma.hbm_to_vmem [thread:$0]  %s289, 512, %s291, %s279, 256, 256, 16
        $region40: #{tpu_custom_call.1} parent=31 // pred_fallthru
          _
        // Predicated region
        $region41: #{tpu_custom_call.1} parent=31 // pred_check
          %p297 = pneg %p96
        $region42: #{tpu_custom_call.1} parent=31 // pred_check_branch
          %299 = sbr.rel (%p297) target = $region44
        $region43: #{tpu_custom_call.1} parent=31 // pred_region
          %s300 = sand.u32 %s24, 1
          %s301 = scalar_lea.sflag [#allocation7], %s300
          %s302 = sand.u32 %s86, 1
          %s303 = smul.addr %s302, 32
          %s304 = scalar_lea.vmem [#allocation8], %s303
          %s305 = smul.u32 2, %s24
          %s307 = ssub.s32 512, 512
          %308 = vsyncadd %s301, %s307
          %s309 = smul.addr %s305, 2
          %s310 = smul.addr %s309, 128
          %s311 = scalar_lea.hbm %s2, %s310
          %s312 = sshll.u32 %s304, 4
          %s313 = int_to_ptr.vmem [resolvable:$true] %s312
          %318 = dma.hbm_to_vmem [thread:$0]  %s311, 512, %s313, %s301, 256, 256, 16
        $region44: #{tpu_custom_call.1} parent=31 // pred_fallthru
          _
      $region32: #{tpu_custom_call.1} parent=5 // pred_fallthru
        _
      %p319 = scmp.le.s32.totalorder 1, %s24
      %p320 = scmp.lt.s32.totalorder %s24, 5
      %p321 = pnand %p319, %p320
      %p322 = pneg %p321
      // Predicated region
      $region45: #{tpu_custom_call.1} parent=5 // pred_check
        _
      $region46: #{tpu_custom_call.1} parent=5 // pred_check_branch
        %324 = sbr.rel (%p321) target = $region48
      $region47: #{tpu_custom_call.1} parent=5 // pred_region
        %s325 = ssub.s32 %s24, 1
        %s326 = sand.u32 %s37, 1
        %s327 = scalar_lea.sflag [#allocation4], %s326
        %s328 = sand.u32 %s37, 1
        %s329 = smul.addr %s328, 32
        %s330 = scalar_lea.vmem [#allocation3], %s329
        // Predicated region
        $region49: #{tpu_custom_call.1} parent=47 // pred_check
          %p331 = pneg %p50
        $region50: #{tpu_custom_call.1} parent=47 // pred_check_branch
          %333 = sbr.rel (%p331) target = $region52
        $region51: #{tpu_custom_call.1} parent=47 // pred_region
          %334 = dma.done %s327, 512
        $region52: #{tpu_custom_call.1} parent=47 // pred_fallthru
          _
        %s335 = sand.u32 %s29, 1
        %s336 = scalar_lea.sflag [#allocation7], %s335
        %s337 = sand.u32 %s63, 1
        %s338 = smul.addr %s337, 32
        %s339 = scalar_lea.vmem [#allocation6], %s338
        // Predicated region
        $region53: #{tpu_custom_call.1} parent=47 // pred_check
          %p340 = pneg %p76
        $region54: #{tpu_custom_call.1} parent=47 // pred_check_branch
          %342 = sbr.rel (%p340) target = $region56
        $region55: #{tpu_custom_call.1} parent=47 // pred_region
          %343 = dma.done %s336, 512
        $region56: #{tpu_custom_call.1} parent=47 // pred_fallthru
          _
        %s344 = sand.u32 %s29, 1
        %s345 = scalar_lea.sflag [#allocation7], %s344
        %s346 = sand.u32 %s89, 1
        %s347 = smul.addr %s346, 32
        %s348 = scalar_lea.vmem [#allocation8], %s347
        // Predicated region
        $region57: #{tpu_custom_call.1} parent=47 // pred_check
          %p349 = pneg %p102
        $region58: #{tpu_custom_call.1} parent=47 // pred_check_branch
          %351 = sbr.rel (%p349) target = $region60
        $region59: #{tpu_custom_call.1} parent=47 // pred_region
          %352 = dma.done %s345, 512
        $region60: #{tpu_custom_call.1} parent=47 // pred_fallthru
          _
        // Predicated region
        $region61: #{tpu_custom_call.1} parent=47 // pred_check
          %p353 = pneg %p123
        $region62: #{tpu_custom_call.1} parent=47 // pred_check_branch
          %355 = sbr.rel (%p353) target = $region64
        $region63: #{tpu_custom_call.1} parent=47 // pred_region
          %356 = dma.done [#allocation10], 4096
        $region64: #{tpu_custom_call.1} parent=47 // pred_fallthru
          _
        %s357 = sand.u32 %s37, 1
        %s358 = scalar_lea.sflag [#allocation4], %s357
        %s359 = sand.u32 %s37, 1
        %s360 = smul.addr %s359, 32
        %s361 = scalar_lea.vmem [#allocation3], %s360
        %p362 = pneg %p50
        %p363 = pneg %p47
        %s364 = sand.u32 %s29, 1
        %s365 = scalar_lea.sflag [#allocation7], %s364
        %s366 = sand.u32 %s63, 1
        %s367 = smul.addr %s366, 32
        %s368 = scalar_lea.vmem [#allocation6], %s367
        %p369 = pneg %p76
        %p370 = pneg %p73
        %s371 = sand.u32 %s29, 1
        %s372 = scalar_lea.sflag [#allocation7], %s371
        %s373 = sand.u32 %s89, 1
        %s374 = smul.addr %s373, 32
        %s375 = scalar_lea.vmem [#allocation8], %s374
        %p376 = pneg %p102
        %p377 = pneg %p99
        %p378 = pneg %p123
        %p379 = pneg %p120
        %p380 = pneg %p144
        %p381 = pneg %p141
        %p382 = pneg %p165
        %p383 = pneg %p162
        %p384 = pneg %p186
        %p385 = pneg %p183
        %p386 = pneg %p212
        %p387 = pneg %p209
        %s388 = sand.u32 %s199, 1
        %s389 = scalar_lea.sflag [#allocation5], %s388
        %s390 = sand.u32 %s199, 1
        %s391 = smul.addr %s390, 32
        %s392 = scalar_lea.vmem [#allocation11], %s391
        %s393 = smul.u32 2, %s29
        %s394 = smul.u32 2, %s29
        %s395 = smul.u32 2, %s29
        %s396 = smul.u32 2, %s29
        %v397 = vld [vmem:[#allocation9] sm:$0xff]
        %v398 = vld [vmem:[#allocation9 + $0x8] sm:$0xff]
        %v399 = vld [vmem:[#allocation9 + $0x10] sm:$0xff]
        %v400 = vld [vmem:[#allocation9 + $0x18] sm:$0xff]
        %v401 = vld [vmem:[#allocation9 + $0x20] sm:$0xff]
        %v402 = vld [vmem:[#allocation9 + $0x28] sm:$0xff]
        %v403 = vld [vmem:[#allocation9 + $0x30] sm:$0xff]
        %v404 = vld [vmem:[#allocation9 + $0x38] sm:$0xff]
        %v405 = vld [vmem:[#allocation9 + $0x40] sm:$0xff]
        %v406 = vld [vmem:[#allocation9 + $0x48] sm:$0xff]
        %v407 = vld [vmem:[#allocation9 + $0x50] sm:$0xff]
        %v408 = vld [vmem:[#allocation9 + $0x58] sm:$0xff]
        %v409 = vld [vmem:[#allocation9 + $0x60] sm:$0xff]
        %v410 = vld [vmem:[#allocation9 + $0x68] sm:$0xff]
        %v411 = vld [vmem:[#allocation9 + $0x70] sm:$0xff]
        %v412 = vld [vmem:[#allocation9 + $0x78] sm:$0xff]
        %v413 = vld [vmem:[#allocation9 + $0x80] sm:$0xff]
        %v414 = vld [vmem:[#allocation9 + $0x88] sm:$0xff]
        %v415 = vld [vmem:[#allocation9 + $0x90] sm:$0xff]
        %v416 = vld [vmem:[#allocation9 + $0x98] sm:$0xff]
        %v417 = vld [vmem:[#allocation9 + $0xa0] sm:$0xff]
        %v418 = vld [vmem:[#allocation9 + $0xa8] sm:$0xff]
        %v419 = vld [vmem:[#allocation9 + $0xb0] sm:$0xff]
        %v420 = vld [vmem:[#allocation9 + $0xb8] sm:$0xff]
        %v421 = vld [vmem:[#allocation9 + $0xc0] sm:$0xff]
        %v422 = vld [vmem:[#allocation9 + $0xc8] sm:$0xff]
        %v423 = vld [vmem:[#allocation9 + $0xd0] sm:$0xff]
        %v424 = vld [vmem:[#allocation9 + $0xd8] sm:$0xff]
        %v425 = vld [vmem:[#allocation9 + $0xe0] sm:$0xff]
        %v426 = vld [vmem:[#allocation9 + $0xe8] sm:$0xff]
        %v427 = vld [vmem:[#allocation9 + $0xf0] sm:$0xff]
        %v428 = vld [vmem:[#allocation9 + $0xf8] sm:$0xff]
        %v429 = vld [vmem:[%s4] sm:$0x1]
        %v430 = vld [vmem:[%s5] sm:$0x1]
        %s431 = sld [smem:[#allocation2]]
        %v432 = vld [vmem:[%s330] sm:$0xff]
        %v433 = vld [vmem:[%s330 + $0x8] sm:$0xff]
        %v434 = vld [vmem:[%s330 + $0x10] sm:$0xff]
        %v435 = vld [vmem:[%s330 + $0x18] sm:$0xff]
        %v436 = vld [vmem:[%s339] sm:$0xff]
        %v437 = vld [vmem:[%s339 + $0x8] sm:$0xff]
        %v438 = vld [vmem:[%s339 + $0x10] sm:$0xff]
        %v439 = vld [vmem:[%s339 + $0x18] sm:$0xff]
        %v440 = vld [vmem:[%s348] sm:$0xff]
        %v441 = vld [vmem:[%s348 + $0x8] sm:$0xff]
        %v442 = vld [vmem:[%s348 + $0x10] sm:$0xff]
        %v443 = vld [vmem:[%s348 + $0x18] sm:$0xff]
        %v445 = vlaneseq
        %v446 = vshrl.u32 %v445, 7
        %v447 = vsub.s32 0, %v446
        %v448 = vrot.slane %v429, %v447
        %450 = vmatprep.subr.mxu0 0.0
        %451 = vmatpush1.msra.mxu0 %v397
        %452 = vmatprep.subr.mxu0 0.0
        %453 = vmatpush1.msra.mxu0 %v398
        %454 = vmatprep.subr.mxu0 0.0
        %455 = vmatpush1.msra.mxu0 %v399
        %456 = vmatprep.subr.mxu0 0.0
        %457 = vmatpush1.msra.mxu0 %v400
        %458 = vmatprep.subr.mxu0 0.0
        %459 = vmatpush1.msra.mxu0 %v401
        %460 = vmatprep.subr.mxu0 0.0
        %461 = vmatpush1.msra.mxu0 %v402
        %462 = vmatprep.subr.mxu0 0.0
        %463 = vmatpush1.msra.mxu0 %v403
        %464 = vmatprep.subr.mxu0 0.0
        %465 = vmatpush1.msra.mxu0 %v404
        %466 = vmatprep.subr.mxu0 0.0
        %467 = vmatpush1.msra.mxu0 %v405
        %468 = vmatprep.subr.mxu0 0.0
        %469 = vmatpush1.msra.mxu0 %v406
        %470 = vmatprep.subr.mxu0 0.0
        %471 = vmatpush1.msra.mxu0 %v407
        %472 = vmatprep.subr.mxu0 0.0
        %473 = vmatpush1.msra.mxu0 %v408
        %474 = vmatprep.subr.mxu0 0.0
        %475 = vmatpush1.msra.mxu0 %v409
        %476 = vmatprep.subr.mxu0 0.0
        %477 = vmatpush1.msra.mxu0 %v410
        %478 = vmatprep.subr.mxu0 0.0
        %479 = vmatpush1.msra.mxu0 %v411
        %480 = vmatprep.subr.mxu0 0.0
        %481 = vmatpush1.msra.mxu0 %v412
        %482 = vmatprep.subr.mxu0 0.0
        %483 = vmatpush1.msra.mxu0 %v413
        %484 = vmatprep.subr.mxu0 0.0
        %485 = vmatpush1.msra.mxu0 %v414
        %486 = vmatprep.subr.mxu0 0.0
        %487 = vmatpush1.msra.mxu0 %v415
        %488 = vmatprep.subr.mxu0 0.0
        %489 = vmatpush1.msra.mxu0 %v416
        %490 = vmatprep.subr.mxu0 0.0
        %491 = vmatpush1.msra.mxu0 %v417
        %492 = vmatprep.subr.mxu0 0.0
        %493 = vmatpush1.msra.mxu0 %v418
        %494 = vmatprep.subr.mxu0 0.0
        %495 = vmatpush1.msra.mxu0 %v419
        %496 = vmatprep.subr.mxu0 0.0
        %497 = vmatpush1.msra.mxu0 %v420
        %498 = vmatprep.subr.mxu0 0.0
        %499 = vmatpush1.msra.mxu0 %v421
        %500 = vmatprep.subr.mxu0 0.0
        %501 = vmatpush1.msra.mxu0 %v422
        %502 = vmatprep.subr.mxu0 0.0
        %503 = vmatpush1.msra.mxu0 %v423
        %504 = vmatprep.subr.mxu0 0.0
        %505 = vmatpush1.msra.mxu0 %v424
        %506 = vmatprep.subr.mxu0 0.0
        %507 = vmatpush1.msra.mxu0 %v425
        %508 = vmatprep.subr.mxu0 0.0
        %509 = vmatpush1.msra.mxu0 %v426
        %510 = vmatprep.subr.mxu0 0.0
        %511 = vmatpush1.msra.mxu0 %v427
        %512 = vmatprep.subr.mxu0 0.0
        %513 = vmatpush1.msra.mxu0 %v428
        %514 = vmatprep.mubr.f32.mxu0 %v433
        %515 = vmatmul.mubr.f32.gmra.mrb[0].mxu0 %v432
        %v516 = vpop.f32.mrb[0].mxu0
        %v517 = vadd.f32 %v448, %v516
        %v518 = vpop.f32.mrb[0].mxu0
        %519 = vmatprep.mubr.f32.mxu0 %v435
        %520 = vmatmul.mubr.f32.gmra.mrb[0].mxu0 %v434
        %v521 = vpop.f32.mrb[0].mxu0
        %v522 = vadd.f32 %v448, %v521
        %v523 = vpop.f32.mrb[0].mxu0
        %524 = vdwg.mxu0
        %v525 = vtanh.pop %v517
        %v526 = vtanh.pop %v522
        %v528 = vlaneseq
        %v529 = vshrl.u32 %v528, 7
        %v530 = vsub.s32 0, %v529
        %v531 = vrot.slane %v430, %v530
        %v533 = vmul.f32 %v525, %v531
        %v534 = vmul.f32 %v526, %v531
        %535 = vadd.xlane.f32.xlu0 %v533
        %v536 = vpop.xlane.xlu0 %535
        %537 = vadd.xlane.f32.xlu0 %v534
        %v538 = vpop.xlane.xlu0 %537
        %v539 = vstv %s431
        %v540 = vadd.f32 %v536, %v539
        %v541 = vadd.f32 %v538, %v539
        %v542 = vmul.f32 %v540, 2.0
        %v543 = vmul.f32 %v541, 2.0
        %544 = vmatprep.subr.mxu0 0.0
        %545 = vmatpush1.msra.mxu0 %v397
        %546 = vmatprep.subr.mxu0 0.0
        %547 = vmatpush1.msra.mxu0 %v398
        %548 = vmatprep.subr.mxu0 0.0
        %549 = vmatpush1.msra.mxu0 %v399
        %550 = vmatprep.subr.mxu0 0.0
        %551 = vmatpush1.msra.mxu0 %v400
        %552 = vmatprep.subr.mxu0 0.0
        %553 = vmatpush1.msra.mxu0 %v401
        %554 = vmatprep.subr.mxu0 0.0
        %555 = vmatpush1.msra.mxu0 %v402
        %556 = vmatprep.subr.mxu0 0.0
        %557 = vmatpush1.msra.mxu0 %v403
        %558 = vmatprep.subr.mxu0 0.0
        %559 = vmatpush1.msra.mxu0 %v404
        %560 = vmatprep.subr.mxu0 0.0
        %561 = vmatpush1.msra.mxu0 %v405
        %562 = vmatprep.subr.mxu0 0.0
        %563 = vmatpush1.msra.mxu0 %v406
        %564 = vmatprep.subr.mxu0 0.0
        %565 = vmatpush1.msra.mxu0 %v407
        %566 = vmatprep.subr.mxu0 0.0
        %567 = vmatpush1.msra.mxu0 %v408
        %568 = vmatprep.subr.mxu0 0.0
        %569 = vmatpush1.msra.mxu0 %v409
        %570 = vmatprep.subr.mxu0 0.0
        %571 = vmatpush1.msra.mxu0 %v410
        %572 = vmatprep.subr.mxu0 0.0
        %573 = vmatpush1.msra.mxu0 %v411
        %574 = vmatprep.subr.mxu0 0.0
        %575 = vmatpush1.msra.mxu0 %v412
        %576 = vmatprep.subr.mxu0 0.0
        %577 = vmatpush1.msra.mxu0 %v413
        %578 = vmatprep.subr.mxu0 0.0
        %579 = vmatpush1.msra.mxu0 %v414
        %580 = vmatprep.subr.mxu0 0.0
        %581 = vmatpush1.msra.mxu0 %v415
        %582 = vmatprep.subr.mxu0 0.0
        %583 = vmatpush1.msra.mxu0 %v416
        %584 = vmatprep.subr.mxu0 0.0
        %585 = vmatpush1.msra.mxu0 %v417
        %586 = vmatprep.subr.mxu0 0.0
        %587 = vmatpush1.msra.mxu0 %v418
        %588 = vmatprep.subr.mxu0 0.0
        %589 = vmatpush1.msra.mxu0 %v419
        %590 = vmatprep.subr.mxu0 0.0
        %591 = vmatpush1.msra.mxu0 %v420
        %592 = vmatprep.subr.mxu0 0.0
        %593 = vmatpush1.msra.mxu0 %v421
        %594 = vmatprep.subr.mxu0 0.0
        %595 = vmatpush1.msra.mxu0 %v422
        %596 = vmatprep.subr.mxu0 0.0
        %597 = vmatpush1.msra.mxu0 %v423
        %598 = vmatprep.subr.mxu0 0.0
        %599 = vmatpush1.msra.mxu0 %v424
        %600 = vmatprep.subr.mxu0 0.0
        %601 = vmatpush1.msra.mxu0 %v425
        %602 = vmatprep.subr.mxu0 0.0
        %603 = vmatpush1.msra.mxu0 %v426
        %604 = vmatprep.subr.mxu0 0.0
        %605 = vmatpush1.msra.mxu0 %v427
        %606 = vmatprep.subr.mxu0 0.0
        %607 = vmatpush1.msra.mxu0 %v428
        %608 = vmatprep.mubr.f32.mxu0 %v437
        %609 = vmatmul.mubr.f32.gmra.mrb[0].mxu0 %v436
        %v610 = vpop.f32.mrb[0].mxu0
        %v611 = vadd.f32 %v448, %v610
        %v612 = vpop.f32.mrb[0].mxu0
        %613 = vmatprep.mubr.f32.mxu0 %v439
        %614 = vmatmul.mubr.f32.gmra.mrb[0].mxu0 %v438
        %v615 = vpop.f32.mrb[0].mxu0
        %v616 = vadd.f32 %v448, %v615
        %v617 = vpop.f32.mrb[0].mxu0
        %618 = vdwg.mxu0
        %v619 = vtanh.pop %v611
        %v620 = vtanh.pop %v616
        %v621 = vmul.f32 %v619, %v531
        %v622 = vmul.f32 %v620, %v531
        %623 = vadd.xlane.f32.xlu0 %v621
        %v624 = vpop.xlane.xlu0 %623
        %625 = vadd.xlane.f32.xlu0 %v622
        %v626 = vpop.xlane.xlu0 %625
        %v627 = vadd.f32 %v624, %v539
        %v628 = vadd.f32 %v626, %v539
        %v629 = vmul.f32 %v627, 2.0
        %v630 = vmul.f32 %v628, 2.0
        %631 = vmatprep.subr.mxu0 0.0
        %632 = vmatpush1.msra.mxu0 %v397
        %633 = vmatprep.subr.mxu0 0.0
        %634 = vmatpush1.msra.mxu0 %v398
        %635 = vmatprep.subr.mxu0 0.0
        %636 = vmatpush1.msra.mxu0 %v399
        %637 = vmatprep.subr.mxu0 0.0
        %638 = vmatpush1.msra.mxu0 %v400
        %639 = vmatprep.subr.mxu0 0.0
        %640 = vmatpush1.msra.mxu0 %v401
        %641 = vmatprep.subr.mxu0 0.0
        %642 = vmatpush1.msra.mxu0 %v402
        %643 = vmatprep.subr.mxu0 0.0
        %644 = vmatpush1.msra.mxu0 %v403
        %645 = vmatprep.subr.mxu0 0.0
        %646 = vmatpush1.msra.mxu0 %v404
        %647 = vmatprep.subr.mxu0 0.0
        %648 = vmatpush1.msra.mxu0 %v405
        %649 = vmatprep.subr.mxu0 0.0
        %650 = vmatpush1.msra.mxu0 %v406
        %651 = vmatprep.subr.mxu0 0.0
        %652 = vmatpush1.msra.mxu0 %v407
        %653 = vmatprep.subr.mxu0 0.0
        %654 = vmatpush1.msra.mxu0 %v408
        %655 = vmatprep.subr.mxu0 0.0
        %656 = vmatpush1.msra.mxu0 %v409
        %657 = vmatprep.subr.mxu0 0.0
        %658 = vmatpush1.msra.mxu0 %v410
        %659 = vmatprep.subr.mxu0 0.0
        %660 = vmatpush1.msra.mxu0 %v411
        %661 = vmatprep.subr.mxu0 0.0
        %662 = vmatpush1.msra.mxu0 %v412
        %663 = vmatprep.subr.mxu0 0.0
        %664 = vmatpush1.msra.mxu0 %v413
        %665 = vmatprep.subr.mxu0 0.0
        %666 = vmatpush1.msra.mxu0 %v414
        %667 = vmatprep.subr.mxu0 0.0
        %668 = vmatpush1.msra.mxu0 %v415
        %669 = vmatprep.subr.mxu0 0.0
        %670 = vmatpush1.msra.mxu0 %v416
        %671 = vmatprep.subr.mxu0 0.0
        %672 = vmatpush1.msra.mxu0 %v417
        %673 = vmatprep.subr.mxu0 0.0
        %674 = vmatpush1.msra.mxu0 %v418
        %675 = vmatprep.subr.mxu0 0.0
        %676 = vmatpush1.msra.mxu0 %v419
        %677 = vmatprep.subr.mxu0 0.0
        %678 = vmatpush1.msra.mxu0 %v420
        %679 = vmatprep.subr.mxu0 0.0
        %680 = vmatpush1.msra.mxu0 %v421
        %681 = vmatprep.subr.mxu0 0.0
        %682 = vmatpush1.msra.mxu0 %v422
        %683 = vmatprep.subr.mxu0 0.0
        %684 = vmatpush1.msra.mxu0 %v423
        %685 = vmatprep.subr.mxu0 0.0
        %686 = vmatpush1.msra.mxu0 %v424
        %687 = vmatprep.subr.mxu0 0.0
        %688 = vmatpush1.msra.mxu0 %v425
        %689 = vmatprep.subr.mxu0 0.0
        %690 = vmatpush1.msra.mxu0 %v426
        %691 = vmatprep.subr.mxu0 0.0
        %692 = vmatpush1.msra.mxu0 %v427
        %693 = vmatprep.subr.mxu0 0.0
        %694 = vmatpush1.msra.mxu0 %v428
        %695 = vmatprep.mubr.f32.mxu0 %v441
        %696 = vmatmul.mubr.f32.gmra.mrb[0].mxu0 %v440
        %v697 = vpop.f32.mrb[0].mxu0
        %v698 = vadd.f32 %v448, %v697
        %v699 = vpop.f32.mrb[0].mxu0
        %700 = vmatprep.mubr.f32.mxu0 %v443
        %701 = vmatmul.mubr.f32.gmra.mrb[0].mxu0 %v442
        %v702 = vpop.f32.mrb[0].mxu0
        %v703 = vadd.f32 %v448, %v702
        %v704 = vpop.f32.mrb[0].mxu0
        %705 = vdwg.mxu0
        %v706 = vtanh.pop %v698
        %v707 = vtanh.pop %v703
        %v708 = vmul.f32 %v706, %v531
        %v709 = vmul.f32 %v707, %v531
        %710 = vadd.xlane.f32.xlu0 %v708
        %v711 = vpop.xlane.xlu0 %710
        %712 = vadd.xlane.f32.xlu0 %v709
        %v713 = vpop.xlane.xlu0 %712
        %v714 = vadd.f32 %v711, %v539
        %v715 = vadd.f32 %v713, %v539
        %v716 = vmul.f32 %v714, 2.0
        %v717 = vmul.f32 %v715, 2.0
        %v718 = vmax.f32 %v542, %v629
        %v719 = vmax.f32 %v543, %v630
        %v720 = vmax.f32 %v718, %v716
        %v721 = vmax.f32 %v719, %v717
        %v722 = vsub.f32 %v542, %v720
        %v723 = vsub.f32 %v543, %v721
        %v724 = vmul.f32 %v722, 1.442695
        %v725 = vpow.pop %v724
        %v726 = vmul.f32 %v723, 1.442695
        %v727 = vpow.pop %v726
        %v728 = vsub.f32 %v629, %v720
        %v729 = vsub.f32 %v630, %v721
        %v730 = vmul.f32 %v728, 1.442695
        %v731 = vpow.pop %v730
        %v732 = vmul.f32 %v729, 1.442695
        %v733 = vpow.pop %v732
        %v734 = vsub.f32 %v716, %v720
        %v735 = vsub.f32 %v717, %v721
        %v736 = vmul.f32 %v734, 1.442695
        %v737 = vpow.pop %v736
        %v738 = vmul.f32 %v735, 1.442695
        %v739 = vpow.pop %v738
        %v740 = vadd.f32 %v725, %v731
        %v741 = vadd.f32 %v727, %v733
        %v742 = vadd.f32 %v740, %v737
        %v743 = vadd.f32 %v741, %v739
        %v744 = vrcp.pop %v742
        %v745 = vmul.f32 1.0, %v744
        %v746 = vrcp.pop %v743
        %v747 = vmul.f32 1.0, %v746
        %v748 = vmul.f32 %v725, %v745
        %v749 = vmul.f32 %v727, %v747
        %v750 = vmul.f32 %v748, %v432
        %v751 = vmul.f32 %v748, %v433
        %v752 = vmul.f32 %v749, %v434
        %v753 = vmul.f32 %v749, %v435
        %v754 = vmul.f32 %v731, %v745
        %v755 = vmul.f32 %v733, %v747
        %v756 = vmul.f32 %v754, %v436
        %v757 = vmul.f32 %v754, %v437
        %v758 = vmul.f32 %v755, %v438
        %v759 = vmul.f32 %v755, %v439
        %v760 = vadd.f32 %v750, %v756
        %v761 = vadd.f32 %v751, %v757
        %v762 = vadd.f32 %v752, %v758
        %v763 = vadd.f32 %v753, %v759
        %v764 = vmul.f32 %v737, %v745
        %v765 = vmul.f32 %v739, %v747
        %v766 = vmul.f32 %v764, %v440
        %v767 = vmul.f32 %v764, %v441
        %v768 = vmul.f32 %v765, %v442
        %v769 = vmul.f32 %v765, %v443
        %v770 = vadd.f32 %v760, %v766
        %v771 = vadd.f32 %v761, %v767
        %v772 = vadd.f32 %v762, %v768
        %v773 = vadd.f32 %v763, %v769
        %774 = vst [vmem:[%s392] sm:$0xff] %v770
        %775 = vst [vmem:[%s392 + $0x8] sm:$0xff] %v771
        %776 = vst [vmem:[%s392 + $0x10] sm:$0xff] %v772
        %777 = vst [vmem:[%s392 + $0x18] sm:$0xff] %v773
        %s778 = sand.u32 %s199, 1
        %s779 = scalar_lea.sflag [#allocation5], %s778
        %s780 = sand.u32 %s199, 1
        %s781 = smul.addr %s780, 32
        %s782 = scalar_lea.vmem [#allocation11], %s781
        // Predicated region
        $region65: #{tpu_custom_call.1} parent=47 // pred_check
          %p783 = pneg %p209
        $region66: #{tpu_custom_call.1} parent=47 // pred_check_branch
          %785 = sbr.rel (%p783) target = $region68
        $region67: #{tpu_custom_call.1} parent=47 // pred_region
          %s786 = smul.u32 2, %s29
          %s788 = ssub.s32 512, 512
          %789 = vsyncadd %s779, %s788
          %s790 = smul.addr %s786, 2
          %s791 = smul.addr %s790, 128
          %s792 = scalar_lea.hbm %s7, %s791
          %s793 = sshll.u32 %s782, 4
          %s794 = int_to_ptr.vmem [resolvable:$true] %s793
          %799 = dma.vmem_to_hbm [thread:$0]  %s794, 512, %s792, %s779, 256, 256, 16
        $region68: #{tpu_custom_call.1} parent=47 // pred_fallthru
          _
      $region48: #{tpu_custom_call.1} parent=5 // pred_fallthru
        _
      %p800 = scmp.le.s32.totalorder 2, %s24
      // Predicated region
      $region69: #{tpu_custom_call.1} parent=5 // pred_check
        %p801 = pneg %p800
      $region70: #{tpu_custom_call.1} parent=5 // pred_check_branch
        %803 = sbr.rel (%p801) target = $region72
      $region71: #{tpu_custom_call.1} parent=5 // pred_region
        %s804 = ssub.s32 %s24, 2
        // Predicated region
        $region73: #{tpu_custom_call.1} parent=71 // pred_check
          %p805 = pneg %p215
        $region74: #{tpu_custom_call.1} parent=71 // pred_check_branch
          %807 = sbr.rel (%p805) target = $region76
        $region75: #{tpu_custom_call.1} parent=71 // pred_region
          %s808 = sand.u32 %s200, 1
          %s809 = scalar_lea.sflag [#allocation5], %s808
          %s810 = sand.u32 %s200, 1
          %s811 = smul.addr %s810, 32
          %s812 = scalar_lea.vmem [#allocation11], %s811
          %813 = dma.done %s809, 512
        $region76: #{tpu_custom_call.1} parent=71 // pred_fallthru
          _
      $region72: #{tpu_custom_call.1} parent=5 // pred_fallthru
        _
    $region6: #{tpu_custom_call.1} parent=1 // loop_footer
      %s28 = sadd.s32 1, %s24
    $region7: #{tpu_custom_call.1} parent=1 // loop_footer_branch
      %23 = sbr.rel target = $region3
    $region8: #{tpu_custom_call.1} parent=1 // loop_exit
      _
    %814 = vsyncpa [#allocation4], 1
    %s815 = scalar_lea.sflag [#allocation4], 1
    %816 = vsyncpa %s815, 1
    %817 = vsyncpa [#allocation7], 1
    %s818 = scalar_lea.sflag [#allocation7], 1
    %819 = vsyncpa %s818, 1
    %820 = vsyncpa [#allocation10], 1
    %821 = vsyncpa [#allocation5], 1
    %s822 = scalar_lea.sflag [#allocation5], 1
    %823 = vsyncpa %s822, 1

</llo_original>
